<compile_context>
chip_gen: v5e
topology: v5e:2x2
jax: 0.10.0
libtpu: 0.0.40
codegen_flags: <defaults>
</compile_context>

<pallas_src>
import jax
import jax.numpy as jnp
from jax import lax
from jax.experimental import pallas as pl
from jax.experimental.pallas import tpu as pltpu

_BN_EPS = 1e-5
_LANE = 128


def _round_up(n, m):
    return ((n + m - 1) // m) * m


def _vmem_budget():
    """Generation-aware VMEM budget for the pipeline planner."""
    cap = 64 * 1024 * 1024
    try:
        info = pltpu.get_tpu_info()
        cap = int(getattr(info, "vmem_capacity_bytes", cap) or cap)
    except Exception:
        pass
    # ~48 MiB on v7x (64 MiB physical), capped at 100 MiB on v5e/v6e (128 MiB).
    return min(cap * 3 // 4, 100 * 1024 * 1024)


def _batch_plan(batch):
    """Return (tile_rows, n_core_splits, padded_batch).

    Tiles are multiples of 16 (bf16 sublane packing).  The batch is zero-padded
    to tile_rows * n_tiles; padding is exact because Linear1 has no bias, so
    padded rows produce h == 0 and contribute nothing to the BN sums.
    """
    if batch <= 128:
        tb = _round_up(batch, 16)
        return tb, 1, tb                       # single tile, no core split
    n_tiles = max(2, -(-batch // 512))         # cap tiles at ~512 rows
    if n_tiles % 2:
        n_tiles += 1                           # even -> clean 2-way core split
    tb = _round_up(-(-batch // n_tiles), 16)
    return tb, 2, tb * n_tiles


# ---------------------------------------------------------------------------
# Pass 1: h = x @ W1 (bf16 in / bf16 out, f32 accumulate) + per-split sum/sumsq
# ---------------------------------------------------------------------------
def _linear1_stats_kernel(x_ref, w1_ref, h_ref, stats_ref):
    # stats_ref block is (1, 2, Hp): one resident accumulator per core split.
    @pl.when(pl.program_id(1) == 0)
    def _():
        stats_ref[...] = jnp.zeros_like(stats_ref)

    h = jnp.dot(x_ref[...], w1_ref[...], preferred_element_type=jnp.float32)
    hb = h.astype(jnp.bfloat16)
    h_ref[...] = hb                                        # halve intermediate traffic

    hf = hb.astype(jnp.float32)                            # stats from the stored values
    s = jnp.sum(hf, axis=0, keepdims=True)                 # (1, Hp)
    ss = jnp.sum(hf * hf, axis=0, keepdims=True)           # (1, Hp)
    stats_ref[0] = stats_ref[0] + jnp.concatenate([s, ss], axis=0)   # full-block update


# ---------------------------------------------------------------------------
# Pass 2: combine stats, BN (batch stats) + ReLU + out = r @ W2 + b2
# ---------------------------------------------------------------------------
def _make_bn_relu_linear2_kernel(inv_n, n_splits):
    inv_n = float(inv_n)

    def kernel(h_ref, stats_ref, gamma_ref, beta_ref, w2_ref, b2_ref, out_ref):
        stats = stats_ref[0]                               # (2, Hp)
        for c in range(1, n_splits):                       # combine per-core partials
            stats = stats + stats_ref[c]
        mean = stats[0:1, :] * inv_n                       # (1, Hp)
        var = jnp.maximum(stats[1:2, :] * inv_n - mean * mean, 0.0)
        #   (h - mean) * gamma * rsqrt(var+eps) + beta == h*scale + shift
        scale = gamma_ref[...] * lax.rsqrt(var + _BN_EPS)  # (1, Hp)
        shift = beta_ref[...] - mean * scale               # (1, Hp)

        r = jnp.maximum(h_ref[...].astype(jnp.float32) * scale + shift, 0.0)
        out = jnp.dot(r.astype(jnp.bfloat16), w2_ref[...],
                      preferred_element_type=jnp.float32) + b2_ref[...]
        out_ref[...] = out.astype(out_ref.dtype)

    return kernel


def projector_forward(x, params):
    """x: (B, dim) float32.  params: dict from init_params (padded, bf16 weights)."""
    B, D = x.shape
    Dp, Hp = params["w1t"].shape
    Pp = params["w2t"].shape[1]
    P = params["proj_size"]

    tb, n_split, Bp = _batch_plan(B)
    nb = Bp // tb
    nb_inner = nb // n_split
    vmem_cap = _vmem_budget()

    # Cast to bf16 + zero-pad batch and contraction dim once in the wrapper.
    xb = jnp.zeros((Bp, Dp), jnp.bfloat16).at[:B, :D].set(x.astype(jnp.bfloat16))

    # ---- pass 1: Linear1 (no bias; BN cancels it) + per-split sum / sumsq ----
    h, stats = pl.pallas_call(
        _linear1_stats_kernel,
        out_shape=(jax.ShapeDtypeStruct((Bp, Hp), jnp.bfloat16),
                   jax.ShapeDtypeStruct((n_split, 2, Hp), jnp.float32)),
        grid=(n_split, nb_inner),
        in_specs=[pl.BlockSpec((tb, Dp), lambda c, i: (c * nb_inner + i, 0)),
                  pl.BlockSpec((Dp, Hp), lambda c, i: (0, 0))],
        out_specs=[pl.BlockSpec((tb, Hp), lambda c, i: (c * nb_inner + i, 0)),
                   pl.BlockSpec((1, 2, Hp), lambda c, i: (c, 0, 0))],
        compiler_params=pltpu.CompilerParams(
            dimension_semantics=("parallel", "arbitrary"),
            vmem_limit_bytes=vmem_cap),
    )(xb, params["w1t"])

    # ---- pass 2: BN fold + ReLU + Linear2 (batch axis parallel -> megacore) ----
    out_pad = pl.pallas_call(
        _make_bn_relu_linear2_kernel(1.0 / B, n_split),
        out_shape=jax.ShapeDtypeStruct((Bp, Pp), jnp.float32),
        grid=(nb,),
        in_specs=[pl.BlockSpec((tb, Hp), lambda i: (i, 0)),
                  pl.BlockSpec((n_split, 2, Hp), lambda i: (0, 0, 0)),
                  pl.BlockSpec((1, Hp), lambda i: (0, 0)),
                  pl.BlockSpec((1, Hp), lambda i: (0, 0)),
                  pl.BlockSpec((Hp, Pp), lambda i: (0, 0)),
                  pl.BlockSpec((1, Pp), lambda i: (0, 0))],
        out_specs=pl.BlockSpec((tb, Pp), lambda i: (i, 0)),
        compiler_params=pltpu.CompilerParams(
            dimension_semantics=("parallel",),
            vmem_limit_bytes=vmem_cap),
    )(h, stats, params["gamma"], params["beta"], params["w2t"], params["b2"])

    return out_pad[:B, :P]


def init_params(key, dim, projection_size, projection_hidden_size):
    """Synthetic init mimicking nn.Linear default (uniform +-1/sqrt(fan_in)) and
    BatchNorm1d default (gamma=1, beta=0).  Kernel weights are pre-transposed,
    zero-padded to lane-dense (multiple-of-128) dims (including `dim`), and
    pre-cast to bf16.  Raw f32 copies (incl. the Linear1 bias, which the kernel
    legitimately drops because training-mode BN cancels it) are kept for the
    module-fidelity reference."""
    k1, k2, k3, k4 = jax.random.split(key, 4)
    H, P = projection_hidden_size, projection_size
    Dp = _round_up(dim, _LANE)
    Hp = _round_up(H, _LANE)
    Pp = _round_up(P, _LANE)

    bound1 = 1.0 / (dim ** 0.5)
    w1 = jax.random.uniform(k1, (H, dim), jnp.float32, -bound1, bound1)
    b1 = jax.random.uniform(k2, (H,), jnp.float32, -bound1, bound1)
    bound2 = 1.0 / (H ** 0.5)
    w2 = jax.random.uniform(k3, (P, H), jnp.float32, -bound2, bound2)
    b2 = jax.random.uniform(k4, (P,), jnp.float32, -bound2, bound2)
    gamma = jnp.ones((H,), jnp.float32)
    beta = jnp.zeros((H,), jnp.float32)

    w1t = jnp.zeros((Dp, Hp), jnp.float32).at[:dim, :H].set(w1.T)
    gamma_p = jnp.zeros((1, Hp), jnp.float32).at[0, :H].set(gamma)
    beta_p = jnp.zeros((1, Hp), jnp.float32).at[0, :H].set(beta)
    w2t = jnp.zeros((Hp, Pp), jnp.float32).at[:H, :P].set(w2.T)
    b2p = jnp.zeros((1, Pp), jnp.float32).at[0, :P].set(b2)

    return {
        "w1t": w1t.astype(jnp.bfloat16),   # (Dp, Hp) bf16
        "gamma": gamma_p,                  # (1, Hp)  f32
        "beta": beta_p,                    # (1, Hp)  f32
        "w2t": w2t.astype(jnp.bfloat16),   # (Hp, Pp) bf16
        "b2": b2p,                         # (1, Pp)  f32
        "proj_size": P,
        "raw": {"w1": w1, "b1": b1, "gamma": gamma, "beta": beta,
                "w2": w2, "b2": b2},
    }


def reference_forward(x, params):
    """Pure-JAX reference matching the kernel's numerics (bf16 GEMM inputs,
    bf16-rounded h for the stats, f32 accumulation, no Linear1 bias)."""
    D = x.shape[1]
    P = params["proj_size"]
    n = x.shape[0]
    xb = x.astype(jnp.bfloat16)
    h = jnp.dot(xb, params["w1t"][:D, :], preferred_element_type=jnp.float32)
    hb = h.astype(jnp.bfloat16).astype(jnp.float32)
    mean = jnp.sum(hb, axis=0, keepdims=True) / n
    var = jnp.maximum(jnp.sum(hb * hb, axis=0, keepdims=True) / n - mean * mean, 0.0)
    scale = params["gamma"] * lax.rsqrt(var + _BN_EPS)
    shift = params["beta"] - mean * scale
    r = jnp.maximum(hb * scale + shift, 0.0)
    out = jnp.dot(r.astype(jnp.bfloat16), params["w2t"],
                  preferred_element_type=jnp.float32) + params["b2"]
    return out[:, :P]


def module_reference(x, raw):
    """f32 PyTorch-equivalent forward (Linear -> BatchNorm1d(train) -> ReLU -> Linear),
    including the Linear1 bias that the kernel drops (BN cancels it exactly)."""
    h = x @ raw["w1"].T + raw["b1"]
    mean = jnp.mean(h, axis=0, keepdims=True)
    var = jnp.var(h, axis=0, keepdims=True)                 # biased, like BN
    hn = (h - mean) * lax.rsqrt(var + _BN_EPS) * raw["gamma"] + raw["beta"]
    r = jnp.maximum(hn, 0.0)
    return r @ raw["w2"].T + raw["b2"]


if __name__ == "__main__":
    # Small shapes consistent with the module: Projector(dim=32, projection_size=16,
    # projection_hidden_size=64), batch=8.
    B, DIM, HIDDEN, PROJ = 8, 32, 64, 16

    key = jax.random.PRNGKey(0)
    kx, kp = jax.random.split(key)
    x = jax.random.normal(kx, (B, DIM), jnp.float32)
    params = init_params(kp, DIM, PROJ, HIDDEN)

    out = projector_forward(x, params)
    out = jax.block_until_ready(out)
    assert out.shape == (B, PROJ)

    ref = reference_forward(x, params)
    assert jnp.allclose(out, ref, atol=2e-3, rtol=2e-3), \
        float(jnp.max(jnp.abs(out - ref)))

    mod = module_reference(x, params["raw"])
    assert jnp.allclose(out, mod, atol=1e-1, rtol=1e-1), \
        float(jnp.max(jnp.abs(out - mod)))

    print("KERNEL_OK")
</pallas_src>

<mosaic_0001>
module attributes {stable_mosaic.version = 11 : i64} {
  func.func @_linear1_stats_kernel(%arg0: i32, %arg1: i32, %arg2: memref<16x128xbf16, #tpu.memory_space<vmem>>, %arg3: memref<128x128xbf16, #tpu.memory_space<vmem>>, %arg4: memref<16x128xbf16, #tpu.memory_space<vmem>>, %arg5: memref<1x2x128xf32, #tpu.memory_space<vmem>>) attributes {dimension_semantics = [#tpu.dimension_semantics<parallel>, #tpu.dimension_semantics<arbitrary>], iteration_bounds = array<i64: 1, 1>, scalar_prefetch = 0 : i64, scratch_operands = 0 : i64, tpu.core_type = #tpu.core_type<tc>, window_params = [{transform_indices = @transform_0, window_bounds = array<i64: 16, 128>}, {pipeline_mode = #tpu.pipeline_mode<synchronous>, transform_indices = @transform_1, window_bounds = array<i64: 128, 128>}, {transform_indices = @transform_2, window_bounds = array<i64: 16, 128>}, {transform_indices = @transform_3, window_bounds = array<i64: 1, 2, 128>}]} {
    %c0_i32 = arith.constant 0 : i32
    %0 = arith.cmpi eq, %arg1, %c0_i32 : i32
    %1 = arith.extui %0 : i1 to i32
    %c0_i32_0 = arith.constant 0 : i32
    %2 = arith.cmpi ne, %1, %c0_i32_0 : i32
    scf.if %2 {
      %cst_14 = arith.constant 0.000000e+00 : f32
      %21 = vector.broadcast %cst_14 : f32 to vector<1x2x128xf32>
      %c0_15 = arith.constant 0 : index
      %c0_16 = arith.constant 0 : index
      %c0_17 = arith.constant 0 : index
      %22 = vector.load %arg5[%c0_15, %c0_16, %c0_17] : memref<1x2x128xf32, #tpu.memory_space<vmem>>, vector<1x2x128xf32>
      tpu.vector_store %arg5[%c0_15, %c0_16, %c0_17], %21 {strides = array<i32>} : memref<1x2x128xf32, #tpu.memory_space<vmem>>, vector<1x2x128xf32>,
    } else {
    }
    %c0 = arith.constant 0 : index
    %c0_1 = arith.constant 0 : index
    %3 = vector.load %arg2[%c0, %c0_1] : memref<16x128xbf16, #tpu.memory_space<vmem>>, vector<16x128xbf16>
    %c0_2 = arith.constant 0 : index
    %c0_3 = arith.constant 0 : index
    %4 = vector.load %arg3[%c0_2, %c0_3] : memref<128x128xbf16, #tpu.memory_space<vmem>>, vector<128x128xbf16>
    %cst = arith.constant dense<0.000000e+00> : vector<16x128xf32>
    %5 = tpu.matmul %3, %4, %cst {dimension_numbers = #tpu.dot_dimension_numbers<[1], [0], [0], [1], [0, 0, 1, 1], [], []>} : vector<16x128xbf16>, vector<128x128xbf16>, vector<16x128xf32> -> vector<16x128xf32>
    %6 = arith.truncf %5 : vector<16x128xf32> to vector<16x128xbf16>
    %c0_4 = arith.constant 0 : index
    %c0_5 = arith.constant 0 : index
    %7 = vector.load %arg4[%c0_4, %c0_5] : memref<16x128xbf16, #tpu.memory_space<vmem>>, vector<16x128xbf16>
    tpu.vector_store %arg4[%c0_4, %c0_5], %6 {strides = array<i32>} : memref<16x128xbf16, #tpu.memory_space<vmem>>, vector<16x128xbf16>,
    %8 = arith.extf %6 : vector<16x128xbf16> to vector<16x128xf32>
    %cst_6 = arith.constant dense<0.000000e+00> : vector<128xf32>
    %9 = vector.multi_reduction <add>, %8, %cst_6 [0] : vector<16x128xf32> to vector<128xf32>
    %10 = vector.shape_cast %9 : vector<128xf32> to vector<1x128xf32>
    %11 = arith.mulf %8, %8 : vector<16x128xf32>
    %cst_7 = arith.constant dense<0.000000e+00> : vector<128xf32>
    %12 = vector.multi_reduction <add>, %11, %cst_7 [0] : vector<16x128xf32> to vector<128xf32>
    %13 = vector.shape_cast %12 : vector<128xf32> to vector<1x128xf32>
    %c0_8 = arith.constant 0 : index
    %c0_9 = arith.constant 0 : index
    %c0_10 = arith.constant 0 : index
    %14 = vector.load %arg5[%c0_8, %c0_9, %c0_10] : memref<1x2x128xf32, #tpu.memory_space<vmem>>, vector<1x2x128xf32>
    %15 = vector.shape_cast %14 : vector<1x2x128xf32> to vector<2x128xf32>
    %16 = tpu.concatenate %10, %13 in 0 : vector<1x128xf32>, vector<1x128xf32> -> vector<2x128xf32>
    %17 = arith.addf %15, %16 : vector<2x128xf32>
    %c0_11 = arith.constant 0 : index
    %c0_12 = arith.constant 0 : index
    %c0_13 = arith.constant 0 : index
    %18 = vector.load %arg5[%c0_11, %c0_12, %c0_13] : memref<1x2x128xf32, #tpu.memory_space<vmem>>, vector<1x2x128xf32>
    %19 = vector.shape_cast %18 : vector<1x2x128xf32> to vector<2x128xf32>
    %20 = vector.shape_cast %17 : vector<2x128xf32> to vector<1x2x128xf32>
    tpu.vector_store %arg5[%c0_11, %c0_12, %c0_13], %20 {strides = array<i32>} : memref<1x2x128xf32, #tpu.memory_space<vmem>>, vector<1x2x128xf32>,
    return
  }
  func.func @transform_0(%arg0: i32, %arg1: i32) -> (i32, i32) {
    %c1_i32 = arith.constant 1 : i32
    %0 = arith.muli %arg0, %c1_i32 : i32
    %1 = arith.addi %0, %arg1 : i32
    %c0_i32 = arith.constant 0 : i32
    %c0_i32_0 = arith.constant 0 : i32
    return %1, %c0_i32 : i32, i32
  }
  func.func @transform_1(%arg0: i32, %arg1: i32) -> (i32, i32) {
    %c0_i32 = arith.constant 0 : i32
    %c0_i32_0 = arith.constant 0 : i32
    %c0_i32_1 = arith.constant 0 : i32
    return %c0_i32, %c0_i32_0 : i32, i32
  }
  func.func @transform_2(%arg0: i32, %arg1: i32) -> (i32, i32) {
    %c1_i32 = arith.constant 1 : i32
    %0 = arith.muli %arg0, %c1_i32 : i32
    %1 = arith.addi %0, %arg1 : i32
    %c0_i32 = arith.constant 0 : i32
    %c0_i32_0 = arith.constant 0 : i32
    return %1, %c0_i32 : i32, i32
  }
  func.func @transform_3(%arg0: i32, %arg1: i32) -> (i32, i32, i32) {
    %c0_i32 = arith.constant 0 : i32
    %c0_i32_0 = arith.constant 0 : i32
    %c0_i32_1 = arith.constant 0 : i32
    return %arg0, %c0_i32, %c0_i32_0 : i32, i32, i32
  }
}

</mosaic_0001>

<llo_original>
// kernel: tpu_custom_call.1
$region0: #{tpu_custom_call.1}
  #allocation0 [shape = 'u32[]', space=smem, size = 0x4, offset = 0x4, fixed_abs, tag = 'smem constant byte address 0x4 - core index']
  #allocation1 [shape = 'u32[72,128]{1,0:T(1,128)}', space=vmem, size = 0x9000, scoped, tag = 'internal scratch']
  %s0 = inlined_call_operand.hbm [shape: bf16[16,128], index: 0, kind: input, shape index: {}]
  %s1 = inlined_call_operand.hbm [shape: bf16[128,128], index: 1, kind: input, shape index: {}]
  %s2 = inlined_call_operand.hbm [shape: bf16[16,128], index: 2, kind: output, shape index: {0}]
  %s3 = inlined_call_operand.hbm [shape: f32[1,2,128], index: 3, kind: output, shape index: {1}]
  %4 = xla_tuple %s2, %s3
  %s5 = sld [smem:[#allocation0]]
  $region38: #{tpu_custom_call.1} parent=0
    _
  %s7 = ssub.s32 1, %s5
  %s8 = scalar_select 0, %s7, %s5
  $region1: #{tpu_custom_call.1} parent=0
    #allocation2 [shape = 'u8[4096]{0}', space=vmem, size = 0x1000, scoped, tag = 'input window, operand 0, single buffered']
    #allocation3 [shape = 's32[1]{0}', space=sflag, size = 0x4, scoped, tag = 'scoped memory for tpu_custom_call.1']
    #allocation4 [shape = 's32[1]{0}', space=sflag, size = 0x4, scoped, tag = 'scoped memory for tpu_custom_call.1']
    #allocation5 [shape = 'u8[32768]{0}', space=vmem, size = 0x8000, scoped, tag = 'input window, operand 1, single buffered']
    #allocation6 [shape = 's32[1]{0}', space=sflag, size = 0x4, scoped, tag = 'scoped memory for tpu_custom_call.1']
    #allocation7 [shape = 'u8[4096]{0}', space=vmem, size = 0x1000, scoped, tag = 'output window, operand 0, single buffered']
    #allocation8 [shape = 'u8[1024]{0}', space=vmem, size = 0x400, scoped, tag = 'output window, operand 1, single buffered']
    #allocation9 [shape = 's32[1]{0}', space=sflag, size = 0x4, scoped, tag = 'scoped memory for tpu_custom_call.1']
    %9 = vsyncpa [#allocation3], 0
    %10 = vsyncpa [#allocation6], 0
    %11 = vsyncpa [#allocation4], 0
    %12 = vsyncpa [#allocation9], 0
    // Predicated region
    $region2: #{tpu_custom_call.1} parent=1 // pred_check
      _
    $region3: #{tpu_custom_call.1} parent=1 // pred_check_branch
      %14 = sbr.rel (0) target = $region5
    $region4: #{tpu_custom_call.1} parent=1 // pred_region
      %s15 = sadd.s32 0, 0
      %s16 = smul.u32 2, %s15
      %18 = vsyncadd [#allocation3], 0
      %s19 = smul.addr %s16, 4
      %s20 = scalar_lea.hbm %s0, %s19
      %s21 = sshll.u32 %s20, 4
      %s22 = int_to_ptr.hbm [resolvable:$true] %s21
      %s23 = sshll.u32 [#allocation2], 4
      %s24 = int_to_ptr.vmem [resolvable:$true] %s23
      %29 = dma.hbm_to_vmem [thread:$0]  %s22, 128, %s24, [#allocation3], 64, 64, 4
    $region5: #{tpu_custom_call.1} parent=1 // pred_fallthru
      _
    // Predicated region
    $region6: #{tpu_custom_call.1} parent=1 // pred_check
      _
    $region7: #{tpu_custom_call.1} parent=1 // pred_check_branch
      %31 = sbr.rel (0) target = $region9
    $region8: #{tpu_custom_call.1} parent=1 // pred_region
      %33 = vsyncadd [#allocation6], 0
      %s34 = sshll.u32 %s1, 4
      %s35 = int_to_ptr.hbm [resolvable:$true] %s34
      %s36 = sshll.u32 [#allocation5], 4
      %s37 = int_to_ptr.vmem [resolvable:$true] %s36
      %42 = dma.hbm_to_vmem [thread:$0]  %s35, 1024, %s37, [#allocation6], 64, 64, 4
    $region9: #{tpu_custom_call.1} parent=1 // pred_fallthru
      _
    // Predicated region
    $region10: #{tpu_custom_call.1} parent=1 // pred_check
      _
    $region11: #{tpu_custom_call.1} parent=1 // pred_check_branch
      %44 = sbr.rel (0) target = $region13
    $region12: #{tpu_custom_call.1} parent=1 // pred_region
      %46 = dma.done [#allocation3], 128
    $region13: #{tpu_custom_call.1} parent=1 // pred_fallthru
      _
    // Predicated region
    $region14: #{tpu_custom_call.1} parent=1 // pred_check
      _
    $region15: #{tpu_custom_call.1} parent=1 // pred_check_branch
      %48 = sbr.rel (0) target = $region17
    $region16: #{tpu_custom_call.1} parent=1 // pred_region
      %50 = dma.done [#allocation6], 1024
    $region17: #{tpu_custom_call.1} parent=1 // pred_fallthru
      _
    %s51 = sadd.s32 0, 0
    %s52 = smul.u32 2, %s51
    %s53 = sadd.s32 0, 0
    %s54 = smul.u32 2, %s53
    %p55 = scmp.eq.s32.totalorder 0, 0
    // Predicated region
    $region18: #{tpu_custom_call.1} parent=1 // pred_check
      %p56 = pneg %p55
    $region19: #{tpu_custom_call.1} parent=1 // pred_check_branch
      %58 = sbr.rel (%p56) target = $region21
    $region20: #{tpu_custom_call.1} parent=1 // pred_region
      %59 = vst [vmem:[#allocation8] sm:$0x3] 0.0
    $region21: #{tpu_custom_call.1} parent=1 // pred_fallthru
      _
    %v60 = vld [vmem:[#allocation2] sm:$0xf]
    %v61 = vld [vmem:[#allocation2 + $0x4] sm:$0xf]
    %v62 = vld [vmem:[#allocation5] sm:$0xf]
    %v63 = vld [vmem:[#allocation5 + $0x4] sm:$0xf]
    %v64 = vld [vmem:[#allocation5 + $0x8] sm:$0xf]
    %v65 = vld [vmem:[#allocation5 + $0xc] sm:$0xf]
    %v66 = vld [vmem:[#allocation5 + $0x10] sm:$0xf]
    %v67 = vld [vmem:[#allocation5 + $0x14] sm:$0xf]
    %v68 = vld [vmem:[#allocation5 + $0x18] sm:$0xf]
    %v69 = vld [vmem:[#allocation5 + $0x1c] sm:$0xf]
    %v70 = vld [vmem:[#allocation5 + $0x20] sm:$0xf]
    %v71 = vld [vmem:[#allocation5 + $0x24] sm:$0xf]
    %v72 = vld [vmem:[#allocation5 + $0x28] sm:$0xf]
    %v73 = vld [vmem:[#allocation5 + $0x2c] sm:$0xf]
    %v74 = vld [vmem:[#allocation5 + $0x30] sm:$0xf]
    %v75 = vld [vmem:[#allocation5 + $0x34] sm:$0xf]
    %v76 = vld [vmem:[#allocation5 + $0x38] sm:$0xf]
    %v77 = vld [vmem:[#allocation5 + $0x3c] sm:$0xf]
    %v80 = vunpack.c.l.b16 %v60
    %v81 = vunpack.c.l.b16 %v61
    %v82 = vpack.c.b16 %v81, %v80
    %v100 = vunpack.c.l.b16 %v62
    %v101 = vunpack.c.l.b16 %v63
    %v102 = vunpack.c.l.b16 %v64
    %v103 = vunpack.c.l.b16 %v65
    %v104 = vunpack.c.l.b16 %v66
    %v105 = vunpack.c.l.b16 %v67
    %v106 = vunpack.c.l.b16 %v68
    %v107 = vunpack.c.l.b16 %v69
    %v108 = vunpack.c.l.b16 %v70
    %v109 = vunpack.c.l.b16 %v71
    %v110 = vunpack.c.l.b16 %v72
    %v111 = vunpack.c.l.b16 %v73
    %v112 = vunpack.c.l.b16 %v74
    %v113 = vunpack.c.l.b16 %v75
    %v114 = vunpack.c.l.b16 %v76
    %v115 = vunpack.c.l.b16 %v77
    %v116 = vpack.c.b16 %v101, %v100
    %v117 = vpack.c.b16 %v103, %v102
    %v118 = vpack.c.b16 %v105, %v104
    %v119 = vpack.c.b16 %v107, %v106
    %v120 = vpack.c.b16 %v109, %v108
    %v121 = vpack.c.b16 %v111, %v110
    %v122 = vpack.c.b16 %v113, %v112
    %v123 = vpack.c.b16 %v115, %v114
    %132 = vmatpush.bf16.msra.mxu0 %v123
    %133 = vmatpush.bf16.msra.mxu0 %v122
    %134 = vmatpush.bf16.msra.mxu0 %v121
    %135 = vmatpush.bf16.msra.mxu0 %v120
    %136 = vmatpush.bf16.msra.mxu0 %v119
    %137 = vmatpush.bf16.msra.mxu0 %v118
    %138 = vmatpush.bf16.msra.mxu0 %v117
    %139 = vmatpush.bf16.msra.mxu0 %v116
    %140 = vmatmul.bf16.gmra.mxu0 %v82
    %v141 = vpop.f32.mrf.mxu0
    %v142 = vadd.f32 0.0, %v141
    %v143 = vpop.f32.mrf.mxu0
    %v144 = vadd.f32 0.0, %v143
    %145 = vdwg.mxu0
    %v146 = vpack.c.bf16 %v142, %v142
    %v147 = vpack.c.bf16 %v144, %v144
    %148 = vst [vmem:[#allocation7] sm:$0xf] %v146
    %149 = vst [vmem:[#allocation7 + $0x4] sm:$0xf] %v147
    %v150 = vunpack.c.l.bf16 %v146
    %v151 = vunpack.c.l.bf16 %v147
    %v152 = vadd.f32 %v150, %v151
    %v153 = vrot.slane %v152, 4
    %v154 = vadd.f32 %v152, %v153
    %v155 = vrot.slane %v154, 2
    %v156 = vadd.f32 %v154, %v155
    %v157 = vrot.slane %v156, 1
    %v158 = vadd.f32 %v156, %v157
    %v159 = vmul.f32 %v150, %v150
    %v160 = vmul.f32 %v151, %v151
    %v161 = vadd.f32 %v159, %v160
    %v162 = vrot.slane %v161, 4
    %v163 = vadd.f32 %v161, %v162
    %v164 = vrot.slane %v163, 2
    %v165 = vadd.f32 %v163, %v164
    %v166 = vrot.slane %v165, 1
    %v167 = vadd.f32 %v165, %v166
    %v168 = vld [vmem:[#allocation8] sm:$0x3]
    %vm169 = vcmask 1040384
    %v170 = vsel %vm169, %v158, %v167
    %v171 = vadd.f32 %v168, %v170
    %172 = vst [vmem:[#allocation8] sm:$0x3] %v171
    // Predicated region
    $region22: #{tpu_custom_call.1} parent=1 // pred_check
      _
    $region23: #{tpu_custom_call.1} parent=1 // pred_check_branch
      %174 = sbr.rel (0) target = $region25
    $region24: #{tpu_custom_call.1} parent=1 // pred_region
      %s175 = sadd.s32 0, 0
      %s176 = smul.u32 2, %s175
      %178 = vsyncadd [#allocation4], 0
      %s179 = smul.addr %s176, 4
      %s180 = scalar_lea.hbm %s2, %s179
      %s181 = sshll.u32 [#allocation7], 4
      %s182 = int_to_ptr.vmem [resolvable:$true] %s181
      %s183 = sshll.u32 %s180, 4
      %s184 = int_to_ptr.hbm [resolvable:$true] %s183
      %189 = dma.vmem_to_hbm [thread:$0]  %s182, 128, %s184, [#allocation4], 64, 64, 4
    $region25: #{tpu_custom_call.1} parent=1 // pred_fallthru
      _
    // Predicated region
    $region26: #{tpu_custom_call.1} parent=1 // pred_check
      _
    $region27: #{tpu_custom_call.1} parent=1 // pred_check_branch
      %191 = sbr.rel (0) target = $region29
    $region28: #{tpu_custom_call.1} parent=1 // pred_region
      %193 = vsyncadd [#allocation9], 0
      %s195 = sshll.u32 [#allocation8], 4
      %s196 = int_to_ptr.vmem [resolvable:$true] %s195
      %s197 = sshll.u32 %s3, 4
      %s198 = int_to_ptr.hbm [resolvable:$true] %s197
      %200 = dma.vmem_to_hbm [thread:$0]  %s196, 32, %s198, [#allocation9]
    $region29: #{tpu_custom_call.1} parent=1 // pred_fallthru
      _
    // Predicated region
    $region30: #{tpu_custom_call.1} parent=1 // pred_check
      _
    $region31: #{tpu_custom_call.1} parent=1 // pred_check_branch
      %202 = sbr.rel (0) target = $region33
    $region32: #{tpu_custom_call.1} parent=1 // pred_region
      %204 = dma.done [#allocation4], 128
    $region33: #{tpu_custom_call.1} parent=1 // pred_fallthru
      _
    // Predicated region
    $region34: #{tpu_custom_call.1} parent=1 // pred_check
      _
    $region35: #{tpu_custom_call.1} parent=1 // pred_check_branch
      %206 = sbr.rel (0) target = $region37
    $region36: #{tpu_custom_call.1} parent=1 // pred_region
      %208 = dma.done [#allocation9], 32
    $region37: #{tpu_custom_call.1} parent=1 // pred_fallthru
      _
    %209 = vsyncpa [#allocation3], 1
    %210 = vsyncpa [#allocation6], 1
    %211 = vsyncpa [#allocation4], 1
    %212 = vsyncpa [#allocation9], 1

</llo_original>
